<compile_context>
chip_gen: v5e
topology: v5e:2x2
jax: 0.10.0
libtpu: 0.0.40
codegen_flags: <defaults>
</compile_context>

<pallas_src>
import jax
import jax.numpy as jnp
from jax import lax
from jax.experimental import pallas as pl
from jax.experimental.pallas import tpu as pltpu


def _round_up(x, m):
    return ((x + m - 1) // m) * m


# --------------------------------------------------------------------------
# Kernel 1: LSTM recurrence over the full caption for one batch tile.
# --------------------------------------------------------------------------
def lstm_recurrence_kernel(x_ref, wih_ref, whh_ref, b_ref, hs_ref, h_scr, c_scr):
    """Runs all T timesteps for one batch tile.

    x_ref   : (T, TB, E)   bf16  time-major LSTM inputs for this batch tile
    wih_ref : (E, 4*Hp)    bf16  weight_ih_l0^T, gate-wise zero-padded H->Hp
    whh_ref : (Hp, 4*Hp)   bf16  weight_hh_l0^T, gate-wise zero-padded
    b_ref   : (1, 4*Hp)    f32   b_ih + b_hh, gate-wise zero-padded
    hs_ref  : (T, TB, Hp)  f32   hidden state h_t for every timestep (output)
    h_scr/c_scr : (TB, Hp) f32   recurrent state (scratch)
    """
    T = x_ref.shape[0]
    Hp = whh_ref.shape[0]

    wih = wih_ref[...]
    whh = whh_ref[...]
    b = b_ref[...]

    h_scr[...] = jnp.zeros_like(h_scr)
    c_scr[...] = jnp.zeros_like(c_scr)

    def step(t, carry):
        x_t = x_ref[t]                               # (TB, E) bf16
        h = h_scr[...]                               # (TB, Hp) f32
        c = c_scr[...]

        # PyTorch LSTM gate layout: [i, f, g, o] along the 4*Hp axis.
        gates = (jnp.dot(x_t, wih, preferred_element_type=jnp.float32)
                 + jnp.dot(h.astype(jnp.bfloat16), whh,
                           preferred_element_type=jnp.float32)
                 + b)                                # (TB, 4*Hp) f32

        i_g = jax.nn.sigmoid(gates[:, 0 * Hp:1 * Hp])
        f_g = jax.nn.sigmoid(gates[:, 1 * Hp:2 * Hp])
        g_g = jnp.tanh(gates[:, 2 * Hp:3 * Hp])
        o_g = jax.nn.sigmoid(gates[:, 3 * Hp:4 * Hp])

        c_new = f_g * c + i_g * g_g
        h_new = o_g * jnp.tanh(c_new)

        h_scr[...] = h_new
        c_scr[...] = c_new
        hs_ref[t] = h_new                            # f32 store, full slab
        return carry

    lax.fori_loop(0, T, step, 0)


# --------------------------------------------------------------------------
# Kernel 2: vocab projection (fc1) as one large tiled matmul.
# --------------------------------------------------------------------------
def fc_kernel(hs_ref, wfc_ref, bfc_ref, out_ref):
    """out = hs @ W_fc^T + b_fc, tiled over (vocab, batch-rows).

    hs_ref  : (TB*T, Hp)  f32  batch-major flattened hidden states
    wfc_ref : (Hp, TN)    bf16 fc1.weight^T vocab tile (zero-padded)
    bfc_ref : (1, TN)     f32  fc1.bias vocab tile
    out_ref : (TB*T, TN)  f32  logits tile
    """
    hs = hs_ref[...].astype(jnp.bfloat16)
    out_ref[...] = (jnp.dot(hs, wfc_ref[...], preferred_element_type=jnp.float32)
                    + bfc_ref[...]).astype(out_ref.dtype)


# --------------------------------------------------------------------------
# Wrapper
# --------------------------------------------------------------------------
def decoder_rnn_forward(features, captions, params, *, batch_tile=128,
                        vocab_tile=512):
    """features: (B, E) f32, captions: (B, Tc) int32. Returns (B, Tc, V) f32."""
    embed_tbl = params["embed"]                      # (V, E)
    w_ih = params["w_ih"]                            # (4H, E) torch layout
    w_hh = params["w_hh"]                            # (4H, H)
    bias = params["b_ih"] + params["b_hh"]           # (4H,)
    w_fc = params["w_fc"]                            # (V, H)
    b_fc = params["b_fc"]                            # (V,)

    B, E = features.shape
    V, H = w_fc.shape
    T = captions.shape[1]                            # 1 feature step + (T-1) tokens

    # ---- tiling / padding ----
    Hp = _round_up(H, 128)                           # lane-dense per-gate width
    TB = _round_up(min(batch_tile, _round_up(B, 8)), 8)
    B_pad = _round_up(B, TB)
    TN = _round_up(min(vocab_tile, _round_up(V, 128)), 128)
    Vp = _round_up(V, TN)

    # ---- build time-major LSTM input (T, B_pad, E) in bf16 ----
    emb_tm = jnp.take(embed_tbl, captions[:, :-1].T, axis=0)        # (T-1, B, E)
    x_tm = jnp.concatenate([features[None, :, :].astype(jnp.float32),
                            emb_tm.astype(jnp.float32)], axis=0)    # (T, B, E)
    if B_pad != B:
        x_tm = jnp.pad(x_tm, ((0, 0), (0, B_pad - B), (0, 0)))
    x_tm = x_tm.astype(jnp.bfloat16)

    # ---- weight prep: gate-wise pad H -> Hp, cast MXU operands to bf16 ----
    def pad_gate_cols(w):                            # (rows, 4H) -> (rows, 4Hp)
        rows = w.shape[0]
        out = jnp.zeros((rows, 4 * Hp), jnp.float32)
        for g in range(4):
            out = out.at[:, g * Hp:g * Hp + H].set(
                w[:, g * H:(g + 1) * H].astype(jnp.float32))
        return out

    w_ih_t = pad_gate_cols(jnp.transpose(w_ih)).astype(jnp.bfloat16)   # (E, 4Hp)
    w_hh_t = jnp.zeros((Hp, 4 * Hp), jnp.float32).at[:H, :].set(
        pad_gate_cols(jnp.transpose(w_hh))).astype(jnp.bfloat16)        # (Hp, 4Hp)
    b2 = pad_gate_cols(bias.reshape(1, -1))                              # (1, 4Hp) f32

    w_fc_t = jnp.zeros((Hp, Vp), jnp.float32).at[:H, :V].set(
        jnp.transpose(w_fc).astype(jnp.float32)).astype(jnp.bfloat16)   # (Hp, Vp)
    b_fc_p = jnp.zeros((1, Vp), jnp.float32).at[:, :V].set(
        b_fc.astype(jnp.float32))                                        # (1, Vp)

    # ---- kernel 1: LSTM recurrence, grid over batch tiles only ----
    n_bt = B_pad // TB
    hs_tm = pl.pallas_call(
        lstm_recurrence_kernel,
        out_shape=jax.ShapeDtypeStruct((T, B_pad, Hp), jnp.float32),
        grid_spec=pltpu.PrefetchScalarGridSpec(
            num_scalar_prefetch=0,
            grid=(n_bt,),
            in_specs=[
                pl.BlockSpec((T, TB, E), lambda bi: (0, bi, 0)),       # x (all T)
                pl.BlockSpec((E, 4 * Hp), lambda bi: (0, 0)),          # W_ih^T
                pl.BlockSpec((Hp, 4 * Hp), lambda bi: (0, 0)),         # W_hh^T
                pl.BlockSpec((1, 4 * Hp), lambda bi: (0, 0)),          # bias
            ],
            out_specs=pl.BlockSpec((T, TB, Hp), lambda bi: (0, bi, 0)),
            scratch_shapes=[
                pltpu.VMEM((TB, Hp), jnp.float32),                     # h
                pltpu.VMEM((TB, Hp), jnp.float32),                     # c
            ],
        ),
        compiler_params=pltpu.CompilerParams(
            dimension_semantics=("parallel",),
        ),
    )(x_tm, w_ih_t, w_hh_t, b2)

    # Small transpose of hs (T*B_pad*Hp, << logits size) to batch-major rows.
    hs_bm = jnp.transpose(hs_tm, (1, 0, 2)).reshape(B_pad * T, Hp)     # f32

    # ---- kernel 2: fc1 projection as one big tiled matmul ----
    MB = TB * T                                                        # row block
    logits2d = pl.pallas_call(
        fc_kernel,
        out_shape=jax.ShapeDtypeStruct((B_pad * T, Vp), jnp.float32),
        grid_spec=pltpu.PrefetchScalarGridSpec(
            num_scalar_prefetch=0,
            grid=(Vp // TN, n_bt),
            in_specs=[
                pl.BlockSpec((MB, Hp), lambda vj, bi: (bi, 0)),        # hs rows
                pl.BlockSpec((Hp, TN), lambda vj, bi: (0, vj)),        # W_fc^T tile
                pl.BlockSpec((1, TN), lambda vj, bi: (0, vj)),         # b_fc tile
            ],
            out_specs=pl.BlockSpec((MB, TN), lambda vj, bi: (bi, vj)),
        ),
        compiler_params=pltpu.CompilerParams(
            dimension_semantics=("parallel", "parallel"),
        ),
    )(hs_bm, w_fc_t, b_fc_p)

    # (B_pad*T, Vp) rows are already batch-major -> metadata-only reshape.
    logits = logits2d.reshape(B_pad, T, Vp)[:B, :, :V]
    return logits


# --------------------------------------------------------------------------
# Pure-JAX reference (f32) replicating DecoderRNN.forward, num_layers=1.
# --------------------------------------------------------------------------
def reference(features, captions, params):
    emb = jnp.take(params["embed"], captions[:, :-1], axis=0)        # (B, T-1, E)
    inputs = jnp.concatenate([features[:, None, :], emb], axis=1)    # (B, T, E)
    B = inputs.shape[0]
    H = params["w_hh"].shape[1]
    h0 = jnp.zeros((B, H), jnp.float32)
    c0 = jnp.zeros((B, H), jnp.float32)

    def step(carry, x_t):
        h, c = carry
        gates = (x_t @ params["w_ih"].T + params["b_ih"]
                 + h @ params["w_hh"].T + params["b_hh"])
        i, f, g, o = jnp.split(gates, 4, axis=-1)
        i = jax.nn.sigmoid(i)
        f = jax.nn.sigmoid(f)
        g = jnp.tanh(g)
        o = jax.nn.sigmoid(o)
        c = f * c + i * g
        h = o * jnp.tanh(c)
        return (h, c), h

    (_, _), hs = jax.lax.scan(step, (h0, c0), jnp.transpose(inputs, (1, 0, 2)))
    out = jnp.einsum("tbh,vh->tbv", hs, params["w_fc"]) + params["b_fc"]
    return jnp.transpose(out, (1, 0, 2))                             # (B, T, V)


if __name__ == "__main__":
    # Small deterministic shapes chosen to exercise batch padding (24 -> 32,
    # two batch tiles), H padding (32 -> 128) and vocab tiling (200 -> 2x128).
    B, T_CAP, E, H, V = 24, 8, 32, 32, 200
    key = jax.random.PRNGKey(0)
    ks = jax.random.split(key, 8)

    features = jax.random.normal(ks[0], (B, E), dtype=jnp.float32)
    captions = jax.random.randint(ks[1], (B, T_CAP), 0, V, dtype=jnp.int32)

    k = 1.0 / jnp.sqrt(jnp.float32(H))
    params = dict(
        embed=0.1 * jax.random.normal(ks[2], (V, E), dtype=jnp.float32),
        w_ih=jax.random.uniform(ks[3], (4 * H, E), jnp.float32, -k, k),
        w_hh=jax.random.uniform(ks[4], (4 * H, H), jnp.float32, -k, k),
        b_ih=jax.random.uniform(ks[5], (4 * H,), jnp.float32, -k, k),
        b_hh=jnp.zeros((4 * H,), jnp.float32),
        w_fc=jax.random.uniform(ks[6], (V, H), jnp.float32, -k, k),
        b_fc=jax.random.uniform(ks[7], (V,), jnp.float32, -k, k),
    )

    out = decoder_rnn_forward(features, captions, params,
                              batch_tile=16, vocab_tile=128)
    out = jax.block_until_ready(out)

    ref = reference(features, captions, params)
    assert out.shape == (B, T_CAP, V), f"bad output shape {out.shape}"
    max_err = float(jnp.max(jnp.abs(out - ref)))
    # bf16 MXU inputs (per perf review); recurrence/accumulation stay f32.
    assert max_err < 3e-2, f"mismatch vs JAX reference, max abs err = {max_err}"

    print("KERNEL_OK")
</pallas_src>

<mosaic_0001>
module attributes {stable_mosaic.version = 11 : i64} {
  func.func @lstm_recurrence_kernel(%arg0: i32, %arg1: memref<8x16x32xbf16, #tpu.memory_space<vmem>>, %arg2: memref<32x512xbf16, #tpu.memory_space<vmem>>, %arg3: memref<128x512xbf16, #tpu.memory_space<vmem>>, %arg4: memref<1x512xf32, #tpu.memory_space<vmem>>, %arg5: memref<8x16x128xf32, #tpu.memory_space<vmem>>, %arg6: memref<16x128xf32, #tpu.memory_space<vmem>>, %arg7: memref<16x128xf32, #tpu.memory_space<vmem>>) attributes {dimension_semantics = [#tpu.dimension_semantics<parallel>], iteration_bounds = array<i64: 2>, scalar_prefetch = 0 : i64, scratch_operands = 2 : i64, tpu.core_type = #tpu.core_type<tc>, window_params = [{transform_indices = @transform_0, window_bounds = array<i64: 8, 16, 32>}, {pipeline_mode = #tpu.pipeline_mode<synchronous>, transform_indices = @transform_1, window_bounds = array<i64: 32, 512>}, {pipeline_mode = #tpu.pipeline_mode<synchronous>, transform_indices = @transform_2, window_bounds = array<i64: 128, 512>}, {pipeline_mode = #tpu.pipeline_mode<synchronous>, transform_indices = @transform_3, window_bounds = array<i64: 1, 512>}, {transform_indices = @transform_4, window_bounds = array<i64: 8, 16, 128>}]} {
    %c0 = arith.constant 0 : index
    %c0_0 = arith.constant 0 : index
    %0 = vector.load %arg2[%c0, %c0_0] : memref<32x512xbf16, #tpu.memory_space<vmem>>, vector<32x512xbf16>
    %c0_1 = arith.constant 0 : index
    %c0_2 = arith.constant 0 : index
    %1 = vector.load %arg3[%c0_1, %c0_2] : memref<128x512xbf16, #tpu.memory_space<vmem>>, vector<128x512xbf16>
    %c0_3 = arith.constant 0 : index
    %c0_4 = arith.constant 0 : index
    %2 = vector.load %arg4[%c0_3, %c0_4] : memref<1x512xf32, #tpu.memory_space<vmem>>, vector<1x512xf32>
    %cst = arith.constant 0.000000e+00 : f32
    %3 = vector.broadcast %cst : f32 to vector<16x128xf32>
    %c0_5 = arith.constant 0 : index
    %c0_6 = arith.constant 0 : index
    %4 = vector.load %arg6[%c0_5, %c0_6] : memref<16x128xf32, #tpu.memory_space<vmem>>, vector<16x128xf32>
    tpu.vector_store %arg6[%c0_5, %c0_6], %3 {strides = array<i32>} : memref<16x128xf32, #tpu.memory_space<vmem>>, vector<16x128xf32>,
    %cst_7 = arith.constant 0.000000e+00 : f32
    %5 = vector.broadcast %cst_7 : f32 to vector<16x128xf32>
    %c0_8 = arith.constant 0 : index
    %c0_9 = arith.constant 0 : index
    %6 = vector.load %arg7[%c0_8, %c0_9] : memref<16x128xf32, #tpu.memory_space<vmem>>, vector<16x128xf32>
    tpu.vector_store %arg7[%c0_8, %c0_9], %5 {strides = array<i32>} : memref<16x128xf32, #tpu.memory_space<vmem>>, vector<16x128xf32>,
    %c0_i32 = arith.constant 0 : i32
    %c8_i32 = arith.constant 8 : i32
    %7 = arith.addi %c0_i32, %c8_i32 : i32
    %c1_i32 = arith.constant 1 : i32
    scf.for %arg8 = %c0_i32 to %7 step %c1_i32  : i32 {
      %8 = arith.index_cast %arg8 : i32 to index
      %c0_11 = arith.constant 0 : index
      %c0_12 = arith.constant 0 : index
      %9 = vector.load %arg1[%8, %c0_11, %c0_12] : memref<8x16x32xbf16, #tpu.memory_space<vmem>>, vector<1x16x32xbf16>
      %10 = vector.shape_cast %9 : vector<1x16x32xbf16> to vector<16x32xbf16>
      %c0_13 = arith.constant 0 : index
      %c0_14 = arith.constant 0 : index
      %11 = vector.load %arg6[%c0_13, %c0_14] : memref<16x128xf32, #tpu.memory_space<vmem>>, vector<16x128xf32>
      %c0_15 = arith.constant 0 : index
      %c0_16 = arith.constant 0 : index
      %12 = vector.load %arg7[%c0_15, %c0_16] : memref<16x128xf32, #tpu.memory_space<vmem>>, vector<16x128xf32>
      %cst_17 = arith.constant dense<0.000000e+00> : vector<16x512xf32>
      %13 = tpu.matmul %10, %0, %cst_17 {dimension_numbers = #tpu.dot_dimension_numbers<[1], [0], [0], [1], [0, 0, 1, 1], [], []>} : vector<16x32xbf16>, vector<32x512xbf16>, vector<16x512xf32> -> vector<16x512xf32>
      %14 = arith.truncf %11 : vector<16x128xf32> to vector<16x128xbf16>
      %cst_18 = arith.constant dense<0.000000e+00> : vector<16x512xf32>
      %15 = tpu.matmul %14, %1, %cst_18 {dimension_numbers = #tpu.dot_dimension_numbers<[1], [0], [0], [1], [0, 0, 1, 1], [], []>} : vector<16x128xbf16>, vector<128x512xbf16>, vector<16x512xf32> -> vector<16x512xf32>
      %16 = arith.addf %13, %15 : vector<16x512xf32>
      %17 = vector.broadcast %2 : vector<1x512xf32> to vector<16x512xf32>
      %18 = arith.addf %16, %17 : vector<16x512xf32>
      %19 = vector.extract_strided_slice %18 {offsets = [0, 0], sizes = [16, 128], strides = [1, 1]} : vector<16x512xf32> to vector<16x128xf32>
      %20 = arith.negf %19 : vector<16x128xf32>
      %21 = math.exp %20 : vector<16x128xf32>
      %cst_19 = arith.constant 1.000000e+00 : f32
      %22 = vector.broadcast %cst_19 : f32 to vector<16x128xf32>
      %23 = arith.addf %22, %21 : vector<16x128xf32>
      %24 = arith.divf %22, %23 : vector<16x128xf32>
      %25 = vector.extract_strided_slice %18 {offsets = [0, 128], sizes = [16, 128], strides = [1, 1]} : vector<16x512xf32> to vector<16x128xf32>
      %26 = arith.negf %25 : vector<16x128xf32>
      %27 = math.exp %26 : vector<16x128xf32>
      %cst_20 = arith.constant 1.000000e+00 : f32
      %28 = vector.broadcast %cst_20 : f32 to vector<16x128xf32>
      %29 = arith.addf %28, %27 : vector<16x128xf32>
      %30 = arith.divf %28, %29 : vector<16x128xf32>
      %31 = vector.extract_strided_slice %18 {offsets = [0, 256], sizes = [16, 128], strides = [1, 1]} : vector<16x512xf32> to vector<16x128xf32>
      %32 = math.tanh %31 : vector<16x128xf32>
      %33 = vector.extract_strided_slice %18 {offsets = [0, 384], sizes = [16, 128], strides = [1, 1]} : vector<16x512xf32> to vector<16x128xf32>
      %34 = arith.negf %33 : vector<16x128xf32>
      %35 = math.exp %34 : vector<16x128xf32>
      %cst_21 = arith.constant 1.000000e+00 : f32
      %36 = vector.broadcast %cst_21 : f32 to vector<16x128xf32>
      %37 = arith.addf %36, %35 : vector<16x128xf32>
      %38 = arith.divf %36, %37 : vector<16x128xf32>
      %39 = arith.mulf %30, %12 : vector<16x128xf32>
      %40 = arith.mulf %24, %32 : vector<16x128xf32>
      %41 = arith.addf %39, %40 : vector<16x128xf32>
      %42 = math.tanh %41 : vector<16x128xf32>
      %43 = arith.mulf %38, %42 : vector<16x128xf32>
      %c0_22 = arith.constant 0 : index
      %c0_23 = arith.constant 0 : index
      %44 = vector.load %arg6[%c0_22, %c0_23] : memref<16x128xf32, #tpu.memory_space<vmem>>, vector<16x128xf32>
      tpu.vector_store %arg6[%c0_22, %c0_23], %43 {strides = array<i32>} : memref<16x128xf32, #tpu.memory_space<vmem>>, vector<16x128xf32>,
      %c0_24 = arith.constant 0 : index
      %c0_25 = arith.constant 0 : index
      %45 = vector.load %arg7[%c0_24, %c0_25] : memref<16x128xf32, #tpu.memory_space<vmem>>, vector<16x128xf32>
      tpu.vector_store %arg7[%c0_24, %c0_25], %41 {strides = array<i32>} : memref<16x128xf32, #tpu.memory_space<vmem>>, vector<16x128xf32>,
      %46 = arith.index_cast %arg8 : i32 to index
      %c0_26 = arith.constant 0 : index
      %c0_27 = arith.constant 0 : index
      %47 = vector.load %arg5[%46, %c0_26, %c0_27] : memref<8x16x128xf32, #tpu.memory_space<vmem>>, vector<1x16x128xf32>
      %48 = vector.shape_cast %47 : vector<1x16x128xf32> to vector<16x128xf32>
      %49 = vector.shape_cast %43 : vector<16x128xf32> to vector<1x16x128xf32>
      tpu.vector_store %arg5[%46, %c0_26, %c0_27], %49 {strides = array<i32>} : memref<8x16x128xf32, #tpu.memory_space<vmem>>, vector<1x16x128xf32>,
    }
    %c8_i32_10 = arith.constant 8 : i32
    return
  }
  func.func @transform_0(%arg0: i32) -> (i32, i32, i32) {
    %c0_i32 = arith.constant 0 : i32
    %c0_i32_0 = arith.constant 0 : i32
    %c0_i32_1 = arith.constant 0 : i32
    return %c0_i32, %arg0, %c0_i32_0 : i32, i32, i32
  }
  func.func @transform_1(%arg0: i32) -> (i32, i32) {
    %c0_i32 = arith.constant 0 : i32
    %c0_i32_0 = arith.constant 0 : i32
    %c0_i32_1 = arith.constant 0 : i32
    return %c0_i32, %c0_i32_0 : i32, i32
  }
  func.func @transform_2(%arg0: i32) -> (i32, i32) {
    %c0_i32 = arith.constant 0 : i32
    %c0_i32_0 = arith.constant 0 : i32
    %c0_i32_1 = arith.constant 0 : i32
    return %c0_i32, %c0_i32_0 : i32, i32
  }
  func.func @transform_3(%arg0: i32) -> (i32, i32) {
    %c0_i32 = arith.constant 0 : i32
    %c0_i32_0 = arith.constant 0 : i32
    %c0_i32_1 = arith.constant 0 : i32
    return %c0_i32, %c0_i32_0 : i32, i32
  }
  func.func @transform_4(%arg0: i32) -> (i32, i32, i32) {
    %c0_i32 = arith.constant 0 : i32
    %c0_i32_0 = arith.constant 0 : i32
    %c0_i32_1 = arith.constant 0 : i32
    return %c0_i32, %arg0, %c0_i32_0 : i32, i32, i32
  }
}

</mosaic_0001>

<llo_original>
// kernel: tpu_custom_call.1
$region0: #{tpu_custom_call.1}
  #allocation0 [shape = 'u32[]', space=smem, size = 0x4, offset = 0x4, fixed_abs, tag = 'smem constant byte address 0x4 - core index']
  #allocation1 [shape = 'u32[72,128]{1,0:T(1,128)}', space=vmem, size = 0x9000, scoped, tag = 'internal scratch']
  #allocation2 [shape = 'f32[16,128]{1,0:T(8,128)}', space=vmem, size = 0x2000, scoped, tag = 'scratch operand']
  #allocation3 [shape = 'f32[16,128]{1,0:T(8,128)}', space=vmem, size = 0x2000, scoped, tag = 'scratch operand']
  #allocation13 [shape = 's32[]', space=sflag, size = 0x4, offset = 0, fixed_abs, tag = 'sflag constant byte address 0x0 - dummy sync flag']
  #allocation15 [shape = 's32[]', space=sflag, size = 0x4, offset = 0, fixed_abs, tag = 'sflag constant byte address 0x0 - dummy sync flag']
  %s0 = inlined_call_operand.hbm [shape: bf16[8,32,32], index: 0, kind: input, shape index: {}]
  %s1 = inlined_call_operand.hbm [shape: bf16[32,512], index: 1, kind: input, shape index: {}]
  %s2 = inlined_call_operand.hbm [shape: bf16[128,512], index: 2, kind: input, shape index: {}]
  %s3 = inlined_call_operand.hbm [shape: f32[1,512], index: 3, kind: input, shape index: {}]
  %s4 = inlined_call_operand.hbm [shape: f32[8,32,128], index: 4, kind: output, shape index: {}]
  %s5 = sld [smem:[#allocation0]]
  $region72: #{tpu_custom_call.1} parent=0
    _
  %s7 = ssub.s32 1, %s5
  %s8 = scalar_select 0, %s7, %s5
  $region1: #{tpu_custom_call.1} parent=0
    #allocation4 [shape = 'u8[65536]{0}', space=vmem, size = 0x10000, scoped, tag = 'input window, operand 0']
    #allocation5 [shape = 's32[2]{0}', space=sflag, size = 0x8, scoped, tag = 'scoped memory for tpu_custom_call.1']
    #allocation6 [shape = 's32[2]{0}', space=sflag, size = 0x8, scoped, tag = 'scoped memory for tpu_custom_call.1']
    #allocation7 [shape = 'u8[32768]{0}', space=vmem, size = 0x8000, scoped, tag = 'input window, operand 1, single buffered']
    #allocation8 [shape = 's32[1]{0}', space=sflag, size = 0x4, scoped, tag = 'scoped memory for tpu_custom_call.1']
    #allocation9 [shape = 'u8[131072]{0}', space=vmem, size = 0x20000, scoped, tag = 'input window, operand 2, single buffered']
    #allocation10 [shape = 'u8[2048]{0}', space=vmem, size = 0x800, scoped, tag = 'input window, operand 3, single buffered']
    #allocation11 [shape = 's32[1]{0}', space=sflag, size = 0x4, scoped, tag = 'scoped memory for tpu_custom_call.1']
    #allocation12 [shape = 'u8[131072]{0}', space=vmem, size = 0x20000, scoped, tag = 'output window, operand 0']
    %9 = vsyncpa [#allocation5], 0
    %s10 = scalar_lea.sflag [#allocation5], 1
    %11 = vsyncpa %s10, 0
    %12 = vsyncpa [#allocation8], 0
    %13 = vsyncpa [#allocation11], 0
    %14 = vsyncpa [#allocation6], 0
    %s15 = scalar_lea.sflag [#allocation6], 1
    %16 = vsyncpa %s15, 0
    loop: start=0, step=1, limit=4
    $region2: #{tpu_custom_call.1} parent=1 // loop_pre_header
      _
    $region3: #{tpu_custom_call.1} parent=1 // loop_header
      %s18 = sphi 0, %s22
      %p19 = scmp.ge.s32.totalorder %s18, 4
      %s28 = sphi 0, %s30
      %s31 = sphi 0, %s28
      %s32 = sphi 0, %s31
      %s48 = sphi 0, %s32
      %s52 = sphi 0, %s52
      %s54 = sphi 0, %s52
      %s55 = sphi 0, %s54
      %s69 = sphi 0, %s55
      %s73 = sphi 0, %s73
      %s75 = sphi 0, %s73
      %s76 = sphi 0, %s75
      %s90 = sphi 0, %s76
      %s94 = sphi 0, %s94
      %s96 = sphi 0, %s94
      %s97 = sphi 0, %s96
      %s111 = sphi 0, %s97
      %s117 = sphi 0, %s119
      %s120 = sphi 0, %s117
      %s121 = sphi 0, %s120
      %s137 = sphi 0, %s121
    $region4: #{tpu_custom_call.1} parent=1 // loop_header_branch
      %21 = sbr.rel (%p19) target = $region8
    $region5: #{tpu_custom_call.1} parent=1 // loop_body
      %s23 = ssub.s32 %s18, 1
      %s24 = ssub.s32 %s18, 2
      %s25 = sadd.s32 %s18, 1
      %s26 = ssub.s32 %s18, %s25
      %p27 = scmp.eq.s32.totalorder %s26, 0
      %s29 = sadd.s32 %s28, 1
      %s30 = scalar_select %p27, %s28, %s29
      %p33 = pneg %p27
      %p34 = scmp.eq.s32.totalorder %s18, 1
      %p35 = por %p33, %p34
      %p36 = scmp.ne.s32.totalorder %s28, %s31
      %p37 = scmp.eq.s32.totalorder %s18, 0
      %p38 = por %p36, %p37
      %p39 = scmp.ne.s32.totalorder %s28, %s31
      %p40 = scmp.eq.s32.totalorder %s23, 1
      %p41 = por %p39, %p40
      %p42 = scmp.ne.s32.totalorder %s31, %s32
      %p43 = scmp.eq.s32.totalorder %s23, 0
      %p44 = por %p42, %p43
      %p45 = scmp.ne.s32.totalorder %s31, %s32
      %p46 = scmp.eq.s32.totalorder %s24, 1
      %p47 = por %p45, %p46
      %p49 = scmp.ne.s32.totalorder %s32, %s48
      %p50 = scmp.eq.s32.totalorder %s24, 0
      %p51 = por %p49, %p50
      %s53 = sadd.s32 %s52, 1
      %p56 = scmp.eq.s32.totalorder %s18, 1
      %p57 = scmp.ne.s32.totalorder %s52, %s54
      %p58 = scmp.eq.s32.totalorder %s18, 0
      %p59 = por %p57, %p58
      %p60 = scmp.ne.s32.totalorder %s52, %s54
      %p61 = scmp.eq.s32.totalorder %s23, 1
      %p62 = por %p60, %p61
      %p63 = scmp.ne.s32.totalorder %s54, %s55
      %p64 = scmp.eq.s32.totalorder %s23, 0
      %p65 = por %p63, %p64
      %p66 = scmp.ne.s32.totalorder %s54, %s55
      %p67 = scmp.eq.s32.totalorder %s24, 1
      %p68 = por %p66, %p67
      %p70 = scmp.ne.s32.totalorder %s55, %s69
      %p71 = scmp.eq.s32.totalorder %s24, 0
      %p72 = por %p70, %p71
      %s74 = sadd.s32 %s73, 1
      %p77 = scmp.eq.s32.totalorder %s18, 1
      %p78 = scmp.ne.s32.totalorder %s73, %s75
      %p79 = scmp.eq.s32.totalorder %s18, 0
      %p80 = por %p78, %p79
      %p81 = scmp.ne.s32.totalorder %s73, %s75
      %p82 = scmp.eq.s32.totalorder %s23, 1
      %p83 = por %p81, %p82
      %p84 = scmp.ne.s32.totalorder %s75, %s76
      %p85 = scmp.eq.s32.totalorder %s23, 0
      %p86 = por %p84, %p85
      %p87 = scmp.ne.s32.totalorder %s75, %s76
      %p88 = scmp.eq.s32.totalorder %s24, 1
      %p89 = por %p87, %p88
      %p91 = scmp.ne.s32.totalorder %s76, %s90
      %p92 = scmp.eq.s32.totalorder %s24, 0
      %p93 = por %p91, %p92
      %s95 = sadd.s32 %s94, 1
      %p98 = scmp.eq.s32.totalorder %s18, 1
      %p99 = scmp.ne.s32.totalorder %s94, %s96
      %p100 = scmp.eq.s32.totalorder %s18, 0
      %p101 = por %p99, %p100
      %p102 = scmp.ne.s32.totalorder %s94, %s96
      %p103 = scmp.eq.s32.totalorder %s23, 1
      %p104 = por %p102, %p103
      %p105 = scmp.ne.s32.totalorder %s96, %s97
      %p106 = scmp.eq.s32.totalorder %s23, 0
      %p107 = por %p105, %p106
      %p108 = scmp.ne.s32.totalorder %s96, %s97
      %p109 = scmp.eq.s32.totalorder %s24, 1
      %p110 = por %p108, %p109
      %p112 = scmp.ne.s32.totalorder %s97, %s111
      %p113 = scmp.eq.s32.totalorder %s24, 0
      %p114 = por %p112, %p113
      %s115 = ssub.s32 %s18, %s25
      %p116 = scmp.eq.s32.totalorder %s115, 0
      %s118 = sadd.s32 %s117, 1
      %s119 = scalar_select %p116, %s117, %s118
      %p122 = pneg %p116
      %p123 = scmp.eq.s32.totalorder %s18, 1
      %p124 = por %p122, %p123
      %p125 = scmp.ne.s32.totalorder %s117, %s120
      %p126 = scmp.eq.s32.totalorder %s18, 0
      %p127 = por %p125, %p126
      %p128 = scmp.ne.s32.totalorder %s117, %s120
      %p129 = scmp.eq.s32.totalorder %s23, 1
      %p130 = por %p128, %p129
      %p131 = scmp.ne.s32.totalorder %s120, %s121
      %p132 = scmp.eq.s32.totalorder %s23, 0
      %p133 = por %p131, %p132
      %p134 = scmp.ne.s32.totalorder %s120, %s121
      %p135 = scmp.eq.s32.totalorder %s24, 1
      %p136 = por %p134, %p135
      %p138 = scmp.ne.s32.totalorder %s121, %s137
      %p139 = scmp.eq.s32.totalorder %s24, 0
      %p140 = por %p138, %p139
      %p141 = scmp.le.s32.totalorder 1, %s18
      %p142 = scmp.lt.s32.totalorder %s18, 3
      %p143 = pnand %p141, %p142
      %p144 = pneg %p143
      // Predicated region
      $region9: #{tpu_custom_call.1} parent=5 // pred_check
        _
      $region10: #{tpu_custom_call.1} parent=5 // pred_check_branch
        %146 = sbr.rel (%p143) target = $region12
      $region11: #{tpu_custom_call.1} parent=5 // pred_region
        %s147 = ssub.s32 %s18, 1
        // Predicated region
        $region13: #{tpu_custom_call.1} parent=11 // pred_check
          %p148 = pneg %p65
        $region14: #{tpu_custom_call.1} parent=11 // pred_check_branch
          %150 = sbr.rel (%p148) target = $region16
        $region15: #{tpu_custom_call.1} parent=11 // pred_region
          %152 = vsyncadd [#allocation8], 0
          %s153 = sshll.u32 %s1, 4
          %s154 = int_to_ptr.hbm [resolvable:$true] %s153
          %s155 = sshll.u32 [#allocation7], 4
          %s156 = int_to_ptr.vmem [resolvable:$true] %s155
          %161 = dma.hbm_to_vmem [thread:$0]  %s154, 1024, %s156, [#allocation8], 256, 256, 16
        $region16: #{tpu_custom_call.1} parent=11 // pred_fallthru
          _
        // Predicated region
        $region17: #{tpu_custom_call.1} parent=11 // pred_check
          %p162 = pneg %p86
        $region18: #{tpu_custom_call.1} parent=11 // pred_check_branch
          %164 = sbr.rel (%p162) target = $region20
        $region19: #{tpu_custom_call.1} parent=11 // pred_region
          %166 = vsyncadd [#allocation8], 0
          %s167 = sshll.u32 %s2, 4
          %s168 = int_to_ptr.hbm [resolvable:$true] %s167
          %s169 = sshll.u32 [#allocation9], 4
          %s170 = int_to_ptr.vmem [resolvable:$true] %s169
          %175 = dma.hbm_to_vmem [thread:$0]  %s168, 4096, %s170, [#allocation8], 256, 256, 16
        $region20: #{tpu_custom_call.1} parent=11 // pred_fallthru
          _
        // Predicated region
        $region21: #{tpu_custom_call.1} parent=11 // pred_check
          %p176 = pneg %p107
        $region22: #{tpu_custom_call.1} parent=11 // pred_check_branch
          %178 = sbr.rel (%p176) target = $region24
        $region23: #{tpu_custom_call.1} parent=11 // pred_region
          %180 = vsyncadd [#allocation11], 0
          %s182 = sshll.u32 %s3, 4
          %s183 = int_to_ptr.hbm [resolvable:$true] %s182
          %s184 = sshll.u32 [#allocation10], 4
          %s185 = int_to_ptr.vmem [resolvable:$true] %s184
          %187 = dma.hbm_to_vmem [thread:$0]  %s183, 64, %s185, [#allocation11]
        $region24: #{tpu_custom_call.1} parent=11 // pred_fallthru
          _
      $region12: #{tpu_custom_call.1} parent=5 // pred_fallthru
        _
      %p188 = scmp.lt.s32.totalorder %s18, 2
      // Predicated region
      $region25: #{tpu_custom_call.1} parent=5 // pred_check
        %p189 = pneg %p188
      $region26: #{tpu_custom_call.1} parent=5 // pred_check_branch
        %191 = sbr.rel (%p189) target = $region28
      $region27: #{tpu_custom_call.1} parent=5 // pred_region
        // Predicated region
        $region29: #{tpu_custom_call.1} parent=27 // pred_check
          %p192 = pneg %p38
        $region30: #{tpu_custom_call.1} parent=27 // pred_check_branch
          %194 = sbr.rel (%p192) target = $region32
        $region31: #{tpu_custom_call.1} parent=27 // pred_region
          #allocation14 [shape = 'u32[6]{0}', space=smem, size = 0x18, scoped, tag = 'DMA stride descriptor']
          %s195 = sand.u32 %s28, 1
          %s196 = scalar_lea.sflag [#allocation5], %s195
          %s197 = sand.u32 %s28, 1
          %s198 = smul.addr %s197, 64
          %s199 = scalar_lea.vmem [#allocation4], %s198
          %s200 = smul.u32 2, %s18
          %202 = vsyncadd %s196, 0
          %s203 = smul.addr %s200, 4
          %s204 = scalar_lea.hbm %s0, %s203
          %s206 = sshll.u32 1, 14
          %s207 = sxor.u32 4294967295, %s206
          %s209 = sld [smem:[#allocation0]]
          %s210 = sadd.s32 2, %s209
          %s212 = sshll.u32 7, 26
          %s213 = sxor.u32 4294967295, %s212
          %s214 = sand.u32 0, %s213
          %s215 = sshll.u32 %s210, 26
          %s216 = sor.u32 %s214, %s215
          %s217 = sshll.u32 %s204, 4
          %s218 = int_to_ptr.hbm [resolvable:$true] %s217
          %s219 = sshll.u32 %s199, 4
          %s220 = int_to_ptr.vmem [resolvable:$true] %s219
          %226 = sst [smem:[#allocation14]] 256
          %s227 = scalar_lea.smem [#allocation14], 1
          %228 = sst [smem:[%s227]] 128
          %s229 = scalar_lea.smem [#allocation14], 2
          %230 = sst [smem:[%s229]] 2
          %s231 = scalar_lea.smem [#allocation14], 3
          %232 = sst [smem:[%s231]] 64
          %s233 = scalar_lea.smem [#allocation14], 4
          %234 = sst [smem:[%s233]] 64
          %s235 = scalar_lea.smem [#allocation14], 5
          %236 = sst [smem:[%s235]] 4
          %238 = dma.general %s218, 1024, %s220, %s196, [#allocation13], [#allocation14], %s216, 0
        $region32: #{tpu_custom_call.1} parent=27 // pred_fallthru
          _
      $region28: #{tpu_custom_call.1} parent=5 // pred_fallthru
        _
      %p239 = scmp.le.s32.totalorder 1, %s18
      %p240 = scmp.lt.s32.totalorder %s18, 3
      %p241 = pnand %p239, %p240
      %p242 = pneg %p241
      // Predicated region
      $region33: #{tpu_custom_call.1} parent=5 // pred_check
        _
      $region34: #{tpu_custom_call.1} parent=5 // pred_check_branch
        %244 = sbr.rel (%p241) target = $region36
      $region35: #{tpu_custom_call.1} parent=5 // pred_region
        %s245 = ssub.s32 %s18, 1
        %s246 = sand.u32 %s31, 1
        %s247 = scalar_lea.sflag [#allocation5], %s246
        %s248 = sand.u32 %s31, 1
        %s249 = smul.addr %s248, 64
        %s250 = scalar_lea.vmem [#allocation4], %s249
        // Predicated region
        $region37: #{tpu_custom_call.1} parent=35 // pred_check
          %p251 = pneg %p44
        $region38: #{tpu_custom_call.1} parent=35 // pred_check_branch
          %253 = sbr.rel (%p251) target = $region40
        $region39: #{tpu_custom_call.1} parent=35 // pred_region
          %255 = dma.done %s247, 1024
        $region40: #{tpu_custom_call.1} parent=35 // pred_fallthru
          _
        // Predicated region
        $region41: #{tpu_custom_call.1} parent=35 // pred_check
          %p256 = pneg %p65
        $region42: #{tpu_custom_call.1} parent=35 // pred_check_branch
          %258 = sbr.rel (%p256) target = $region44
        $region43: #{tpu_custom_call.1} parent=35 // pred_region
          %260 = dma.done [#allocation8], 1024
        $region44: #{tpu_custom_call.1} parent=35 // pred_fallthru
          _
        // Predicated region
        $region45: #{tpu_custom_call.1} parent=35 // pred_check
          %p261 = pneg %p86
        $region46: #{tpu_custom_call.1} parent=35 // pred_check_branch
          %263 = sbr.rel (%p261) target = $region48
        $region47: #{tpu_custom_call.1} parent=35 // pred_region
          %265 = dma.done [#allocation8], 4096
        $region48: #{tpu_custom_call.1} parent=35 // pred_fallthru
          _
        // Predicated region
        $region49: #{tpu_custom_call.1} parent=35 // pred_check
          %p266 = pneg %p107
        $region50: #{tpu_custom_call.1} parent=35 // pred_check_branch
          %268 = sbr.rel (%p266) target = $region52
        $region51: #{tpu_custom_call.1} parent=35 // pred_region
          %270 = dma.done [#allocation11], 64
        $region52: #{tpu_custom_call.1} parent=35 // pred_fallthru
          _
        %s271 = sand.u32 %s31, 1
        %s272 = scalar_lea.sflag [#allocation5], %s271
        %s273 = sand.u32 %s31, 1
        %s274 = smul.addr %s273, 64
        %s275 = scalar_lea.vmem [#allocation4], %s274
        %p276 = pneg %p44
        %p277 = pneg %p41
        %p278 = pneg %p65
        %p279 = pneg %p62
        %p280 = pneg %p86
        %p281 = pneg %p83
        %p282 = pneg %p107
        %p283 = pneg %p104
        %p284 = pneg %p133
        %p285 = pneg %p130
        %s286 = sand.u32 %s120, 1
        %s287 = scalar_lea.sflag [#allocation6], %s286
        %s288 = sand.u32 %s120, 1
        %s289 = smul.addr %s288, 128
        %s290 = scalar_lea.vmem [#allocation12], %s289
        %s291 = smul.u32 2, %s23
        %s292 = smul.u32 2, %s23
        %v294 = vld [vmem:[#allocation7] sm:$0xff]
        %v295 = vld [vmem:[#allocation7 + $0x8] sm:$0xff]
        %v296 = vld [vmem:[#allocation7 + $0x10] sm:$0xff]
        %v297 = vld [vmem:[#allocation7 + $0x18] sm:$0xff]
        %v298 = vld [vmem:[#allocation7 + $0x20] sm:$0xff]
        %v299 = vld [vmem:[#allocation7 + $0x28] sm:$0xff]
        %v300 = vld [vmem:[#allocation7 + $0x30] sm:$0xff]
        %v301 = vld [vmem:[#allocation7 + $0x38] sm:$0xff]
        %v302 = vld [vmem:[#allocation9] sm:$0xff]
        %v303 = vld [vmem:[#allocation9 + $0x8] sm:$0xff]
        %v304 = vld [vmem:[#allocation9 + $0x10] sm:$0xff]
        %v305 = vld [vmem:[#allocation9 + $0x18] sm:$0xff]
        %v306 = vld [vmem:[#allocation9 + $0x20] sm:$0xff]
        %v307 = vld [vmem:[#allocation9 + $0x28] sm:$0xff]
        %v308 = vld [vmem:[#allocation9 + $0x30] sm:$0xff]
        %v309 = vld [vmem:[#allocation9 + $0x38] sm:$0xff]
        %v310 = vld [vmem:[#allocation9 + $0x40] sm:$0xff]
        %v311 = vld [vmem:[#allocation9 + $0x48] sm:$0xff]
        %v312 = vld [vmem:[#allocation9 + $0x50] sm:$0xff]
        %v313 = vld [vmem:[#allocation9 + $0x58] sm:$0xff]
        %v314 = vld [vmem:[#allocation9 + $0x60] sm:$0xff]
        %v315 = vld [vmem:[#allocation9 + $0x68] sm:$0xff]
        %v316 = vld [vmem:[#allocation9 + $0x70] sm:$0xff]
        %v317 = vld [vmem:[#allocation9 + $0x78] sm:$0xff]
        %v318 = vld [vmem:[#allocation9 + $0x80] sm:$0xff]
        %v319 = vld [vmem:[#allocation9 + $0x88] sm:$0xff]
        %v320 = vld [vmem:[#allocation9 + $0x90] sm:$0xff]
        %v321 = vld [vmem:[#allocation9 + $0x98] sm:$0xff]
        %v322 = vld [vmem:[#allocation9 + $0xa0] sm:$0xff]
        %v323 = vld [vmem:[#allocation9 + $0xa8] sm:$0xff]
        %v324 = vld [vmem:[#allocation9 + $0xb0] sm:$0xff]
        %v325 = vld [vmem:[#allocation9 + $0xb8] sm:$0xff]
        %v326 = vld [vmem:[#allocation9 + $0xc0] sm:$0xff]
        %v327 = vld [vmem:[#allocation9 + $0xc8] sm:$0xff]
        %v328 = vld [vmem:[#allocation9 + $0xd0] sm:$0xff]
        %v329 = vld [vmem:[#allocation9 + $0xd8] sm:$0xff]
        %v330 = vld [vmem:[#allocation9 + $0xe0] sm:$0xff]
        %v331 = vld [vmem:[#allocation9 + $0xe8] sm:$0xff]
        %v332 = vld [vmem:[#allocation9 + $0xf0] sm:$0xff]
        %v333 = vld [vmem:[#allocation9 + $0xf8] sm:$0xff]
        %v334 = vld [vmem:[#allocation10] sm:$0xf]
        %335 = vst [vmem:[#allocation2] sm:$0xff] 0.0
        %336 = vst [vmem:[#allocation2 + $0x8] sm:$0xff] 0.0
        %337 = vst [vmem:[#allocation3] sm:$0xff] 0.0
        %338 = vst [vmem:[#allocation3 + $0x8] sm:$0xff] 0.0
        loop: start=0, step=1, limit=8
        $region53: #{tpu_custom_call.1} parent=35 // loop_pre_header
          _
        $region54: #{tpu_custom_call.1} parent=35 // loop_header
          %s340 = sphi 0, %s344
          %p341 = scmp.ge.s32.totalorder %s340, 8
        $region55: #{tpu_custom_call.1} parent=35 // loop_header_branch
          %343 = sbr.rel (%p341) target = $region59
        $region56: #{tpu_custom_call.1} parent=35 // loop_body
          %s345 = smul.u32 %s340, 2
          %s346 = smul.addr %s345, 4
          %s347 = scalar_lea.vmem %s250, %s346 [#allocation4]
          %v348 = vld [vmem:[%s347] sm:$0xf]
          %v349 = vld [vmem:[%s347 + $0x4] sm:$0xf]
          %v350 = vld [vmem:[#allocation2] sm:$0xff]
          %v351 = vld [vmem:[#allocation2 + $0x8] sm:$0xff]
          %v352 = vld [vmem:[#allocation3] sm:$0xff]
          %v353 = vld [vmem:[#allocation3 + $0x8] sm:$0xff]
          %v354 = vpack.c.bf16 %v351, %v350
          %v387 = vunpack.c.l.b16 %v302
          %v388 = vunpack.c.h.b16 %v302
          %v389 = vunpack.c.l.b16 %v303
          %v390 = vunpack.c.h.b16 %v303
          %v391 = vunpack.c.l.b16 %v304
          %v392 = vunpack.c.h.b16 %v304
          %v393 = vunpack.c.l.b16 %v305
          %v394 = vunpack.c.h.b16 %v305
          %v395 = vunpack.c.l.b16 %v306
          %v396 = vunpack.c.h.b16 %v306
          %v397 = vunpack.c.l.b16 %v307
          %v398 = vunpack.c.h.b16 %v307
          %v399 = vunpack.c.l.b16 %v308
          %v400 = vunpack.c.h.b16 %v308
          %v401 = vunpack.c.l.b16 %v309
          %v402 = vunpack.c.h.b16 %v309
          %v403 = vunpack.c.l.b16 %v310
          %v404 = vunpack.c.h.b16 %v310
          %v405 = vunpack.c.l.b16 %v311
          %v406 = vunpack.c.h.b16 %v311
          %v407 = vunpack.c.l.b16 %v312
          %v408 = vunpack.c.h.b16 %v312
          %v409 = vunpack.c.l.b16 %v313
          %v410 = vunpack.c.h.b16 %v313
          %v411 = vunpack.c.l.b16 %v314
          %v412 = vunpack.c.h.b16 %v314
          %v413 = vunpack.c.l.b16 %v315
          %v414 = vunpack.c.h.b16 %v315
          %v415 = vunpack.c.l.b16 %v316
          %v416 = vunpack.c.h.b16 %v316
          %v417 = vunpack.c.l.b16 %v317
          %v418 = vunpack.c.h.b16 %v317
          %v419 = vunpack.c.l.b16 %v318
          %v420 = vunpack.c.h.b16 %v318
          %v421 = vunpack.c.l.b16 %v319
          %v422 = vunpack.c.h.b16 %v319
          %v423 = vunpack.c.l.b16 %v320
          %v424 = vunpack.c.h.b16 %v320
          %v425 = vunpack.c.l.b16 %v321
          %v426 = vunpack.c.h.b16 %v321
          %v427 = vunpack.c.l.b16 %v322
          %v428 = vunpack.c.h.b16 %v322
          %v429 = vunpack.c.l.b16 %v323
          %v430 = vunpack.c.h.b16 %v323
          %v431 = vunpack.c.l.b16 %v324
          %v432 = vunpack.c.h.b16 %v324
          %v433 = vunpack.c.l.b16 %v325
          %v434 = vunpack.c.h.b16 %v325
          %v435 = vunpack.c.l.b16 %v326
          %v436 = vunpack.c.h.b16 %v326
          %v437 = vunpack.c.l.b16 %v327
          %v438 = vunpack.c.h.b16 %v327
          %v439 = vunpack.c.l.b16 %v328
          %v440 = vunpack.c.h.b16 %v328
          %v441 = vunpack.c.l.b16 %v329
          %v442 = vunpack.c.h.b16 %v329
          %v443 = vunpack.c.l.b16 %v330
          %v444 = vunpack.c.h.b16 %v330
          %v445 = vunpack.c.l.b16 %v331
          %v446 = vunpack.c.h.b16 %v331
          %v447 = vunpack.c.l.b16 %v332
          %v448 = vunpack.c.h.b16 %v332
          %v449 = vunpack.c.l.b16 %v333
          %v450 = vunpack.c.h.b16 %v333
          %v451 = vpack.c.b16 %v391, %v387
          %v452 = vpack.c.b16 %v392, %v388
          %v453 = vpack.c.b16 %v393, %v389
          %v454 = vpack.c.b16 %v394, %v390
          %v455 = vpack.c.b16 %v399, %v395
          %v456 = vpack.c.b16 %v400, %v396
          %v457 = vpack.c.b16 %v401, %v397
          %v458 = vpack.c.b16 %v402, %v398
          %v459 = vpack.c.b16 %v407, %v403
          %v460 = vpack.c.b16 %v408, %v404
          %v461 = vpack.c.b16 %v409, %v405
          %v462 = vpack.c.b16 %v410, %v406
          %v463 = vpack.c.b16 %v415, %v411
          %v464 = vpack.c.b16 %v416, %v412
          %v465 = vpack.c.b16 %v417, %v413
          %v466 = vpack.c.b16 %v418, %v414
          %v467 = vpack.c.b16 %v423, %v419
          %v468 = vpack.c.b16 %v424, %v420
          %v469 = vpack.c.b16 %v425, %v421
          %v470 = vpack.c.b16 %v426, %v422
          %v471 = vpack.c.b16 %v431, %v427
          %v472 = vpack.c.b16 %v432, %v428
          %v473 = vpack.c.b16 %v433, %v429
          %v474 = vpack.c.b16 %v434, %v430
          %v475 = vpack.c.b16 %v439, %v435
          %v476 = vpack.c.b16 %v440, %v436
          %v477 = vpack.c.b16 %v441, %v437
          %v478 = vpack.c.b16 %v442, %v438
          %v479 = vpack.c.b16 %v447, %v443
          %v480 = vpack.c.b16 %v448, %v444
          %v481 = vpack.c.b16 %v449, %v445
          %v482 = vpack.c.b16 %v450, %v446
          %515 = vmatpush.bf16.msra.mxu0 %v479
          %516 = vmatpush.bf16.msra.mxu0 %v475
          %517 = vmatpush.bf16.msra.mxu0 %v471
          %518 = vmatpush.bf16.msra.mxu0 %v467
          %519 = vmatpush.bf16.msra.mxu0 %v463
          %520 = vmatpush.bf16.msra.mxu0 %v459
          %521 = vmatpush.bf16.msra.mxu0 %v455
          %522 = vmatpush.bf16.msra.mxu0 %v451
          %523 = vmatmul.bf16.gmra.mxu0 %v354
          %v524 = vpop.f32.mrf.mxu0
          %v525 = vadd.f32 0.0, %v524
          %v526 = vpop.f32.mrf.mxu0
          %v527 = vadd.f32 0.0, %v526
          %528 = vdwg.mxu0
          %529 = vmatpush.bf16.msra.mxu0 %v480
          %530 = vmatpush.bf16.msra.mxu0 %v476
          %531 = vmatpush.bf16.msra.mxu0 %v472
          %532 = vmatpush.bf16.msra.mxu0 %v468
          %533 = vmatpush.bf16.msra.mxu0 %v464
          %534 = vmatpush.bf16.msra.mxu0 %v460
          %535 = vmatpush.bf16.msra.mxu0 %v456
          %536 = vmatpush.bf16.msra.mxu0 %v452
          %537 = vmatmul.bf16.gmra.mxu0 %v354
          %v538 = vpop.f32.mrf.mxu0
          %v539 = vadd.f32 0.0, %v538
          %v540 = vpop.f32.mrf.mxu0
          %v541 = vadd.f32 0.0, %v540
          %542 = vdwg.mxu0
          %543 = vmatpush.bf16.msra.mxu0 %v481
          %544 = vmatpush.bf16.msra.mxu0 %v477
          %545 = vmatpush.bf16.msra.mxu0 %v473
          %546 = vmatpush.bf16.msra.mxu0 %v469
          %547 = vmatpush.bf16.msra.mxu0 %v465
          %548 = vmatpush.bf16.msra.mxu0 %v461
          %549 = vmatpush.bf16.msra.mxu0 %v457
          %550 = vmatpush.bf16.msra.mxu0 %v453
          %551 = vmatmul.bf16.gmra.mxu0 %v354
          %v552 = vpop.f32.mrf.mxu0
          %v553 = vadd.f32 0.0, %v552
          %v554 = vpop.f32.mrf.mxu0
          %v555 = vadd.f32 0.0, %v554
          %556 = vdwg.mxu0
          %557 = vmatpush.bf16.msra.mxu0 %v482
          %558 = vmatpush.bf16.msra.mxu0 %v478
          %559 = vmatpush.bf16.msra.mxu0 %v474
          %560 = vmatpush.bf16.msra.mxu0 %v470
          %561 = vmatpush.bf16.msra.mxu0 %v466
          %562 = vmatpush.bf16.msra.mxu0 %v462
          %563 = vmatpush.bf16.msra.mxu0 %v458
          %564 = vmatpush.bf16.msra.mxu0 %v454
          %565 = vmatmul.bf16.gmra.mxu0 %v354
          %v566 = vpop.f32.mrf.mxu0
          %v567 = vadd.f32 0.0, %v566
          %v568 = vpop.f32.mrf.mxu0
          %v569 = vadd.f32 0.0, %v568
          %570 = vdwg.mxu0
          %v573 = vunpack.c.l.b16 %v348
          %v574 = vunpack.c.l.b16 %v349
          %v575 = vpack.c.b16 %v574, %v573
          %v584 = vunpack.c.l.b16 %v294
          %v585 = vunpack.c.h.b16 %v294
          %v586 = vunpack.c.l.b16 %v295
          %v587 = vunpack.c.h.b16 %v295
          %v588 = vunpack.c.l.b16 %v296
          %v589 = vunpack.c.h.b16 %v296
          %v590 = vunpack.c.l.b16 %v297
          %v591 = vunpack.c.h.b16 %v297
          %v592 = vunpack.c.l.b16 %v298
          %v593 = vunpack.c.h.b16 %v298
          %v594 = vunpack.c.l.b16 %v299
          %v595 = vunpack.c.h.b16 %v299
          %v596 = vunpack.c.l.b16 %v300
          %v597 = vunpack.c.h.b16 %v300
          %v598 = vunpack.c.l.b16 %v301
          %v599 = vunpack.c.h.b16 %v301
          %v600 = vpack.c.b16 %v588, %v584
          %v601 = vpack.c.b16 %v589, %v585
          %v602 = vpack.c.b16 %v590, %v586
          %v603 = vpack.c.b16 %v591, %v587
          %v604 = vpack.c.b16 %v596, %v592
          %v605 = vpack.c.b16 %v597, %v593
          %v606 = vpack.c.b16 %v598, %v594
          %v607 = vpack.c.b16 %v599, %v595
          %vm616 = vcmask 261120
          %v618 = vsel %vm616, %v575, 0
          %620 = vmatpush.bf16.msra.mxu0 0
          %621 = vmatpush.bf16.msra.mxu0 0
          %622 = vmatpush.bf16.msra.mxu0 0
          %623 = vmatpush.bf16.msra.mxu0 0
          %624 = vmatpush.bf16.msra.mxu0 0
          %625 = vmatpush.bf16.msra.mxu0 0
          %626 = vmatpush.bf16.msra.mxu0 %v604
          %627 = vmatpush.bf16.msra.mxu0 %v600
          %628 = vmatmul.bf16.gmra.mxu0 %v618
          %v629 = vpop.f32.mrf.mxu0
          %v630 = vadd.f32 %v525, %v629
          %v631 = vpop.f32.mrf.mxu0
          %v632 = vadd.f32 %v527, %v631
          %633 = vdwg.mxu0
          %634 = vmatpush.bf16.msra.mxu0 0
          %635 = vmatpush.bf16.msra.mxu0 0
          %636 = vmatpush.bf16.msra.mxu0 0
          %637 = vmatpush.bf16.msra.mxu0 0
          %638 = vmatpush.bf16.msra.mxu0 0
          %639 = vmatpush.bf16.msra.mxu0 0
          %640 = vmatpush.bf16.msra.mxu0 %v605
          %641 = vmatpush.bf16.msra.mxu0 %v601
          %642 = vmatmul.bf16.gmra.mxu0 %v618
          %v643 = vpop.f32.mrf.mxu0
          %v644 = vadd.f32 %v539, %v643
          %v645 = vpop.f32.mrf.mxu0
          %v646 = vadd.f32 %v541, %v645
          %647 = vdwg.mxu0
          %648 = vmatpush.bf16.msra.mxu0 0
          %649 = vmatpush.bf16.msra.mxu0 0
          %650 = vmatpush.bf16.msra.mxu0 0
          %651 = vmatpush.bf16.msra.mxu0 0
          %652 = vmatpush.bf16.msra.mxu0 0
          %653 = vmatpush.bf16.msra.mxu0 0
          %654 = vmatpush.bf16.msra.mxu0 %v606
          %655 = vmatpush.bf16.msra.mxu0 %v602
          %656 = vmatmul.bf16.gmra.mxu0 %v618
          %v657 = vpop.f32.mrf.mxu0
          %v658 = vadd.f32 %v553, %v657
          %v659 = vpop.f32.mrf.mxu0
          %v660 = vadd.f32 %v555, %v659
          %661 = vdwg.mxu0
          %662 = vmatpush.bf16.msra.mxu0 0
          %663 = vmatpush.bf16.msra.mxu0 0
          %664 = vmatpush.bf16.msra.mxu0 0
          %665 = vmatpush.bf16.msra.mxu0 0
          %666 = vmatpush.bf16.msra.mxu0 0
          %667 = vmatpush.bf16.msra.mxu0 0
          %668 = vmatpush.bf16.msra.mxu0 %v607
          %669 = vmatpush.bf16.msra.mxu0 %v603
          %670 = vmatmul.bf16.gmra.mxu0 %v618
          %v671 = vpop.f32.mrf.mxu0
          %v672 = vadd.f32 %v567, %v671
          %v673 = vpop.f32.mrf.mxu0
          %v674 = vadd.f32 %v569, %v673
          %675 = vdwg.mxu0
          %v677 = vperm.slane %v334, 0
          %v678 = vperm.slane %v334, 1
          %v679 = vperm.slane %v334, 2
          %v680 = vperm.slane %v334, 3
          %v685 = vadd.f32 %v630, %v677
          %v686 = vadd.f32 %v644, %v678
          %v687 = vadd.f32 %v658, %v679
          %v688 = vadd.f32 %v672, %v680
          %v689 = vadd.f32 %v632, %v677
          %v690 = vadd.f32 %v646, %v678
          %v691 = vadd.f32 %v660, %v679
          %v692 = vadd.f32 %v674, %v680
          %v693 = vxor.u32 %v685, 2147483648
          %v694 = vxor.u32 %v689, 2147483648
          %v695 = vmul.f32 %v693, 1.442695
          %v696 = vpow.pop %v695
          %v697 = vmul.f32 %v694, 1.442695
          %v698 = vpow.pop %v697
          %v699 = vadd.f32 %v696, 1.0
          %v700 = vadd.f32 %v698, 1.0
          %v701 = vrcp.pop %v699
          %v702 = vmul.f32 %v699, %v701
          %v703 = vsub.f32 1.0, %v702
          %v704 = vmul.f32 %v701, %v703
          %v705 = vadd.f32 %v701, %v704
          %vm706 = vweird.f32 %v699
          %vm707 = vweird.f32 %v701
          %vm708 = vmor %vm706, %vm707
          %v709 = vsel %vm708, %v701, %v705
          %v710 = vand.u32 2147483647, %v699
          %vm711 = vcmp.eq.f32.partialorder %v710, 8.507059e+37
          %v712 = vand.u32 %v699, 2147483648
          %v713 = vor.u32 1.1754944e-38, %v712
          %v714 = vsel %vm711, %v713, %v709
          %v715 = vmul.f32 1.0, %v714
          %v716 = vrcp.pop %v700
          %v717 = vmul.f32 %v700, %v716
          %v718 = vsub.f32 1.0, %v717
          %v719 = vmul.f32 %v716, %v718
          %v720 = vadd.f32 %v716, %v719
          %vm721 = vweird.f32 %v700
          %vm722 = vweird.f32 %v716
          %vm723 = vmor %vm721, %vm722
          %v724 = vsel %vm723, %v716, %v720
          %v725 = vand.u32 2147483647, %v700
          %vm726 = vcmp.eq.f32.partialorder %v725, 8.507059e+37
          %v727 = vand.u32 %v700, 2147483648
          %v728 = vor.u32 1.1754944e-38, %v727
          %v729 = vsel %vm726, %v728, %v724
          %v730 = vmul.f32 1.0, %v729
          %v731 = vxor.u32 %v686, 2147483648
          %v732 = vxor.u32 %v690, 2147483648
          %v733 = vmul.f32 %v731, 1.442695
          %v734 = vpow.pop %v733
          %v735 = vmul.f32 %v732, 1.442695
          %v736 = vpow.pop %v735
          %v737 = vadd.f32 %v734, 1.0
          %v738 = vadd.f32 %v736, 1.0
          %v739 = vrcp.pop %v737
          %v740 = vmul.f32 %v737, %v739
          %v741 = vsub.f32 1.0, %v740
          %v742 = vmul.f32 %v739, %v741
          %v743 = vadd.f32 %v739, %v742
          %vm744 = vweird.f32 %v737
          %vm745 = vweird.f32 %v739
          %vm746 = vmor %vm744, %vm745
          %v747 = vsel %vm746, %v739, %v743
          %v748 = vand.u32 2147483647, %v737
          %vm749 = vcmp.eq.f32.partialorder %v748, 8.507059e+37
          %v750 = vand.u32 %v737, 2147483648
          %v751 = vor.u32 1.1754944e-38, %v750
          %v752 = vsel %vm749, %v751, %v747
          %v753 = vmul.f32 1.0, %v752
          %v754 = vrcp.pop %v738
          %v755 = vmul.f32 %v738, %v754
          %v756 = vsub.f32 1.0, %v755
          %v757 = vmul.f32 %v754, %v756
          %v758 = vadd.f32 %v754, %v757
          %vm759 = vweird.f32 %v738
          %vm760 = vweird.f32 %v754
          %vm761 = vmor %vm759, %vm760
          %v762 = vsel %vm761, %v754, %v758
          %v763 = vand.u32 2147483647, %v738
          %vm764 = vcmp.eq.f32.partialorder %v763, 8.507059e+37
          %v765 = vand.u32 %v738, 2147483648
          %v766 = vor.u32 1.1754944e-38, %v765
          %v767 = vsel %vm764, %v766, %v762
          %v768 = vmul.f32 1.0, %v767
          %v769 = vtanh.pop %v687
          %v770 = vtanh.pop %v691
          %v771 = vxor.u32 %v688, 2147483648
          %v772 = vxor.u32 %v692, 2147483648
          %v773 = vmul.f32 %v771, 1.442695
          %v774 = vpow.pop %v773
          %v775 = vmul.f32 %v772, 1.442695
          %v776 = vpow.pop %v775
          %v777 = vadd.f32 %v774, 1.0
          %v778 = vadd.f32 %v776, 1.0
          %v779 = vrcp.pop %v777
          %v780 = vmul.f32 %v777, %v779
          %v781 = vsub.f32 1.0, %v780
          %v782 = vmul.f32 %v779, %v781
          %v783 = vadd.f32 %v779, %v782
          %vm784 = vweird.f32 %v777
          %vm785 = vweird.f32 %v779
          %vm786 = vmor %vm784, %vm785
          %v787 = vsel %vm786, %v779, %v783
          %v788 = vand.u32 2147483647, %v777
          %vm789 = vcmp.eq.f32.partialorder %v788, 8.507059e+37
          %v790 = vand.u32 %v777, 2147483648
          %v791 = vor.u32 1.1754944e-38, %v790
          %v792 = vsel %vm789, %v791, %v787
          %v793 = vmul.f32 1.0, %v792
          %v794 = vrcp.pop %v778
          %v795 = vmul.f32 %v778, %v794
          %v796 = vsub.f32 1.0, %v795
          %v797 = vmul.f32 %v794, %v796
          %v798 = vadd.f32 %v794, %v797
          %vm799 = vweird.f32 %v778
          %vm800 = vweird.f32 %v794
          %vm801 = vmor %vm799, %vm800
          %v802 = vsel %vm801, %v794, %v798
          %v803 = vand.u32 2147483647, %v778
          %vm804 = vcmp.eq.f32.partialorder %v803, 8.507059e+37
          %v805 = vand.u32 %v778, 2147483648
          %v806 = vor.u32 1.1754944e-38, %v805
          %v807 = vsel %vm804, %v806, %v802
          %v808 = vmul.f32 1.0, %v807
          %v809 = vmul.f32 %v753, %v352
          %v810 = vmul.f32 %v768, %v353
          %v811 = vmul.f32 %v715, %v769
          %v812 = vmul.f32 %v730, %v770
          %v813 = vadd.f32 %v809, %v811
          %v814 = vadd.f32 %v810, %v812
          %v815 = vtanh.pop %v813
          %v816 = vtanh.pop %v814
          %v817 = vmul.f32 %v793, %v815
          %v818 = vmul.f32 %v808, %v816
          %819 = vst [vmem:[#allocation2] sm:$0xff] %v817
          %820 = vst [vmem:[#allocation2 + $0x8] sm:$0xff] %v818
          %821 = vst [vmem:[#allocation3] sm:$0xff] %v813
          %822 = vst [vmem:[#allocation3 + $0x8] sm:$0xff] %v814
          %s823 = smul.u32 %s340, 16
          %s824 = scalar_lea.vmem %s290, %s823 [#allocation12]
          %825 = vst [vmem:[%s824] sm:$0xff] %v817
          %826 = vst [vmem:[%s824 + $0x8] sm:$0xff] %v818
        $region57: #{tpu_custom_call.1} parent=35 // loop_footer
          %s344 = sadd.s32 1, %s340
        $region58: #{tpu_custom_call.1} parent=35 // loop_footer_branch
          %339 = sbr.rel target = $region54
        $region59: #{tpu_custom_call.1} parent=35 // loop_exit
          _
        %s827 = sand.u32 %s120, 1
        %s828 = scalar_lea.sflag [#allocation6], %s827
        %s829 = sand.u32 %s120, 1
        %s830 = smul.addr %s829, 128
        %s831 = scalar_lea.vmem [#allocation12], %s830
        // Predicated region
        $region60: #{tpu_custom_call.1} parent=35 // pred_check
          %p832 = pneg %p130
        $region61: #{tpu_custom_call.1} parent=35 // pred_check_branch
          %834 = sbr.rel (%p832) target = $region63
        $region62: #{tpu_custom_call.1} parent=35 // pred_region
          #allocation16 [shape = 'u32[6]{0}', space=smem, size = 0x18, scoped, tag = 'DMA stride descriptor']
          %s835 = smul.u32 2, %s23
          %837 = vsyncadd %s828, 0
          %s838 = smul.addr %s835, 8
          %s839 = scalar_lea.hbm %s4, %s838
          %s841 = sshll.u32 1, 14
          %s842 = sxor.u32 4294967295, %s841
          %s845 = sshll.u32 7, 18
          %s846 = sxor.u32 4294967295, %s845
          %s847 = sand.u32 0, %s846
          %s849 = sor.u32 %s847, 0
          %s850 = sshll.u32 %s831, 4
          %s851 = int_to_ptr.vmem [resolvable:$true] %s850
          %s852 = sshll.u32 %s839, 4
          %s853 = int_to_ptr.hbm [resolvable:$true] %s852
          %859 = sst [smem:[#allocation16]] 256
          %s860 = scalar_lea.smem [#allocation16], 1
          %861 = sst [smem:[%s860]] 512
          %s862 = scalar_lea.smem [#allocation16], 2
          %863 = sst [smem:[%s862]] 2
          %s864 = scalar_lea.smem [#allocation16], 3
          %865 = sst [smem:[%s864]] 128
          %s866 = scalar_lea.smem [#allocation16], 4
          %867 = sst [smem:[%s866]] 128
          %s868 = scalar_lea.smem [#allocation16], 5
          %869 = sst [smem:[%s868]] 8
          %871 = dma.general %s851, 2048, %s853, %s828, [#allocation15], [#allocation16], %s849, 0
        $region63: #{tpu_custom_call.1} parent=35 // pred_fallthru
          _
      $region36: #{tpu_custom_call.1} parent=5 // pred_fallthru
        _
      %p872 = scmp.le.s32.totalorder 2, %s18
      // Predicated region
      $region64: #{tpu_custom_call.1} parent=5 // pred_check
        %p873 = pneg %p872
      $region65: #{tpu_custom_call.1} parent=5 // pred_check_branch
        %875 = sbr.rel (%p873) target = $region67
      $region66: #{tpu_custom_call.1} parent=5 // pred_region
        %s876 = ssub.s32 %s18, 2
        // Predicated region
        $region68: #{tpu_custom_call.1} parent=66 // pred_check
          %p877 = pneg %p136
        $region69: #{tpu_custom_call.1} parent=66 // pred_check_branch
          %879 = sbr.rel (%p877) target = $region71
        $region70: #{tpu_custom_call.1} parent=66 // pred_region
          %s880 = sand.u32 %s121, 1
          %s881 = scalar_lea.sflag [#allocation6], %s880
          %s882 = sand.u32 %s121, 1
          %s883 = smul.addr %s882, 128
          %s884 = scalar_lea.vmem [#allocation12], %s883
          %886 = dma.done %s881, 2048
        $region71: #{tpu_custom_call.1} parent=66 // pred_fallthru
          _
      $region67: #{tpu_custom_call.1} parent=5 // pred_fallthru
        _
    $region6: #{tpu_custom_call.1} parent=1 // loop_footer
      %s22 = sadd.s32 1, %s18
    $region7: #{tpu_custom_call.1} parent=1 // loop_footer_branch
      %17 = sbr.rel target = $region3
    $region8: #{tpu_custom_call.1} parent=1 // loop_exit
      _
    %887 = vsyncpa [#allocation5], 1
    %s888 = scalar_lea.sflag [#allocation5], 1
    %889 = vsyncpa %s888, 1
    %890 = vsyncpa [#allocation8], 1
    %891 = vsyncpa [#allocation11], 1
    %892 = vsyncpa [#allocation6], 1
    %s893 = scalar_lea.sflag [#allocation6], 1
    %894 = vsyncpa %s893, 1

</llo_original>
